<compile_context>
chip_gen: v5e
topology: v5e:2x2
jax: 0.10.0
libtpu: 0.0.40
codegen_flags: <defaults>
</compile_context>

<pallas_src>
import functools

import jax
import jax.numpy as jnp
from jax.experimental import pallas as pl
from jax.experimental.pallas import tpu as pltpu


def _round_up(x, m):
    return (x + m - 1) // m * m


def _rbm_cell_kernel(patch_ref, w_ref, b_ref, out_ref):
    # patch_ref: (K, NBLK)      im2col patch, K = KH*KW*CCTRL_pad, NBLK = BT*Npad (lane-dense)
    # w_ref    : (2*HID, K)     fused [ctrl | data] conv weights, one column per (tap, channel)
    # b_ref    : (2*HID, 1)     fused bias [bc, bd]
    # out_ref  : (2*HID, NBLK)  stacked output: rows [0:HID] = ctrl*tanh(data), [HID:] = ctrl
    hid = w_ref.shape[0] // 2

    # One MXU matmul: both convolutions, all taps, all channels, all pixels
    # (and the whole batch tile) at once.  f32 accumulation.
    acc = jnp.dot(w_ref[...], patch_ref[...], preferred_element_type=jnp.float32)
    acc = acc + b_ref[...]                                   # bias broadcast over lanes

    ctrl_out = jax.nn.sigmoid(acc[:hid])                     # rows 0..HID-1  -> ctrl conv
    data_out = jnp.tanh(acc[hid:])                           # rows HID..2HID -> data conv

    # Single stacked, lane-dense store (sublane-aligned concat when HID % 8 == 0).
    out_ref[...] = jnp.concatenate([ctrl_out * data_out, ctrl_out], axis=0)


@functools.partial(jax.jit,
                   static_argnames=("kernel_size", "matmul_dtype", "num_btiles"))
def rbm_cell_forward(x_nchw, c_nchw, wd_hwio, bd, wc_hwio, bc, kernel_size,
                     matmul_dtype=jnp.float32, num_btiles=None):
    """x_nchw: (B, CIN, H, W); c_nchw: (B, HID, H, W). Returns (h, ctrl_out) in NCHW.

    matmul_dtype: MXU operand dtype (f32 exact; bf16 fast path valid on v5e/v6e/v7x,
                  accumulation and epilogue stay f32).
    num_btiles  : grid steps over the batch-folded N axis. Default: 2 when B >= 2
                  (keeps both v7x TensorCores busy), else 1. Use 1 to fully fold
                  the batch into a single step on single-TC v5e/v6e.
    """
    B, CIN, H, W = x_nchw.shape
    HID = c_nchw.shape[1]
    KH, KW = kernel_size
    ph, pw = KH // 2, KW // 2

    CCTRL = CIN + HID
    CCTRL_pad = _round_up(CCTRL, 8)          # sublane-aligned channel count
    K = KH * KW * CCTRL_pad                  # fused contraction dim (144 here)
    HW = H * W
    Npad = _round_up(HW, 128)                # lane-dense per-image output length

    if num_btiles is None:
        num_btiles = 2 if B >= 2 else 1
    batch_tile = pl.cdiv(B, num_btiles)
    Bpad = batch_tile * num_btiles
    NBLK = batch_tile * Npad                 # matmul N per grid step (multiple of 128)

    # --- wrapper-side layout plumbing (cheap XLA pad / slice / transpose) -----
    # [c, x] channel-major, zero-pad channels to CCTRL_pad, "same"-pad spatially,
    # then build the im2col patch so the kernel sees perfectly aligned tiles.
    ctrl = jnp.concatenate([c_nchw, x_nchw], axis=1)                       # (B, CCTRL, H, W)
    ctrl = jnp.pad(ctrl, ((0, 0), (0, CCTRL_pad - CCTRL), (ph, ph), (pw, pw)))
    taps = [ctrl[:, :, kh:kh + H, kw:kw + W].reshape(B, CCTRL_pad, HW)
            for kh in range(KH) for kw in range(KW)]
    patch = jnp.concatenate(taps, axis=1)                                  # (B, K, HW)
    patch = jnp.pad(patch, ((0, Bpad - B), (0, 0), (0, Npad - HW)))        # zero pad stays zero
    patch = jnp.transpose(patch, (1, 0, 2)).reshape(K, Bpad * Npad)        # batch folded into N
    patch = patch.astype(matmul_dtype)

    # Fused weights (2*HID, K): rows [0:HID] = ctrl conv over all CCTRL channels,
    # rows [HID:2HID] = data conv (zeros on the c rows and pad channels, wd on x rows).
    wc_full = jnp.pad(wc_hwio, ((0, 0), (0, 0), (0, CCTRL_pad - CCTRL), (0, 0)))
    wd_full = jnp.zeros((KH, KW, CCTRL_pad, HID), wd_hwio.dtype)
    wd_full = wd_full.at[:, :, HID:HID + CIN, :].set(wd_hwio)
    w_stack = jnp.concatenate([wc_full, wd_full], axis=-1)                 # (KH,KW,CCTRL_pad,2HID)
    w_fused = jnp.transpose(w_stack, (3, 0, 1, 2)).reshape(2 * HID, K)     # tap-major, chan-minor
    w_fused = w_fused.astype(matmul_dtype)

    b_fused = jnp.concatenate([bc, bd]).reshape(2 * HID, 1).astype(jnp.float32)

    out = pl.pallas_call(
        _rbm_cell_kernel,
        out_shape=jax.ShapeDtypeStruct((2 * HID, Bpad * Npad), jnp.float32),
        grid_spec=pltpu.PrefetchScalarGridSpec(
            num_scalar_prefetch=0,
            grid=(num_btiles,),
            in_specs=[
                pl.BlockSpec((K, NBLK), lambda i: (0, i)),           # im2col patch tile
                pl.BlockSpec((2 * HID, K), lambda i: (0, 0)),        # fused weights (resident)
                pl.BlockSpec((2 * HID, 1), lambda i: (0, 0)),        # fused bias
            ],
            out_specs=pl.BlockSpec((2 * HID, NBLK), lambda i: (0, i)),
        ),
        compiler_params=pltpu.CompilerParams(
            dimension_semantics=("parallel",)),                      # v7x: one batch tile per TC
    )(patch, w_fused, b_fused)

    # Unstack h / ctrl_out, drop batch & lane padding, back to NCHW (metadata work).
    out = out.reshape(2 * HID, Bpad, Npad)[:, :B, :HW]
    out = jnp.transpose(out, (1, 0, 2))                              # (B, 2*HID, H*W)
    h = out[:, :HID].reshape(B, HID, H, W)
    ctrl_out = out[:, HID:].reshape(B, HID, H, W)
    return h, ctrl_out


def _reference(x_nchw, c_nchw, wd_hwio, bd, wc_hwio, bc):
    """Pure-JAX reference (lax conv) for correctness check."""
    HID = bd.shape[0]
    dn = ("NCHW", "HWIO", "NCHW")
    ctrl_in = jnp.concatenate([c_nchw, x_nchw], axis=1)
    conv_d = jax.lax.conv_general_dilated(x_nchw, wd_hwio, (1, 1), "SAME",
                                          dimension_numbers=dn)
    conv_c = jax.lax.conv_general_dilated(ctrl_in, wc_hwio, (1, 1), "SAME",
                                          dimension_numbers=dn)
    data_out = jnp.tanh(conv_d + bd.reshape(1, HID, 1, 1))
    ctrl_out = jax.nn.sigmoid(conv_c + bc.reshape(1, HID, 1, 1))
    return ctrl_out * data_out, ctrl_out


if __name__ == "__main__":
    # Module config (small, deterministic).
    B, CIN, HID, H, W = 2, 4, 8, 16, 16
    KH, KW = 3, 3

    key = jax.random.PRNGKey(0)
    kx, kc, kwd, kbd, kwc, kbc = jax.random.split(key, 6)

    x = jax.random.normal(kx, (B, CIN, H, W), jnp.float32)       # input_tensor (NCHW)
    c = jax.random.normal(kc, (B, HID, H, W), jnp.float32)       # cur_state    (NCHW)

    # Deterministic parameter init (Conv2d-shaped, stored as HWIO).
    wd = 0.1 * jax.random.normal(kwd, (KH, KW, CIN, HID), jnp.float32)
    bd = 0.1 * jax.random.normal(kbd, (HID,), jnp.float32)
    wc = 0.1 * jax.random.normal(kwc, (KH, KW, CIN + HID, HID), jnp.float32)
    bc = 0.1 * jax.random.normal(kbc, (HID,), jnp.float32)

    h_ref, c_ref = _reference(x, c, wd, bd, wc, bc)

    # Default: 2 batch tiles (keeps both v7x TensorCores busy), f32 MXU operands.
    h, ctrl = rbm_cell_forward(x, c, wd, bd, wc, bc, (KH, KW))
    h = jax.block_until_ready(h)
    ctrl = jax.block_until_ready(ctrl)
    assert h.shape == (B, HID, H, W) and ctrl.shape == (B, HID, H, W)
    assert jnp.allclose(h, h_ref, atol=1e-4), "h mismatch vs reference (f32)"
    assert jnp.allclose(ctrl, c_ref, atol=1e-4), "ctrl mismatch vs reference (f32)"

    # Fully batch-folded single grid step (best layout for single-TC v5e/v6e).
    h1, ctrl1 = rbm_cell_forward(x, c, wd, bd, wc, bc, (KH, KW), num_btiles=1)
    h1 = jax.block_until_ready(h1)
    ctrl1 = jax.block_until_ready(ctrl1)
    assert jnp.allclose(h1, h_ref, atol=1e-4), "h mismatch vs reference (folded)"
    assert jnp.allclose(ctrl1, c_ref, atol=1e-4), "ctrl mismatch vs reference (folded)"

    # bf16 MXU operands (valid on v5e/v6e/v7x); f32 accumulation + f32 epilogue.
    h16, ctrl16 = rbm_cell_forward(x, c, wd, bd, wc, bc, (KH, KW),
                                   matmul_dtype=jnp.bfloat16)
    h16 = jax.block_until_ready(h16)
    ctrl16 = jax.block_until_ready(ctrl16)
    assert jnp.allclose(h16, h_ref, atol=3e-2), "h mismatch vs reference (bf16)"
    assert jnp.allclose(ctrl16, c_ref, atol=3e-2), "ctrl mismatch vs reference (bf16)"

    # TODO(synk): the `rate < p_TD` input.detach() branch is autograd-only
    # (forward values identical), so it is intentionally omitted.
    print("KERNEL_OK")
</pallas_src>

<mosaic_0001>
module attributes {stable_mosaic.version = 11 : i64} {
  func.func @_rbm_cell_kernel(%arg0: i32, %arg1: memref<144x256xf32, #tpu.memory_space<vmem>>, %arg2: memref<16x144xf32, #tpu.memory_space<vmem>>, %arg3: memref<16x1xf32, #tpu.memory_space<vmem>>, %arg4: memref<16x256xf32, #tpu.memory_space<vmem>>) attributes {dimension_semantics = [#tpu.dimension_semantics<parallel>], iteration_bounds = array<i64: 2>, scalar_prefetch = 0 : i64, scratch_operands = 0 : i64, tpu.core_type = #tpu.core_type<tc>, window_params = [{transform_indices = @transform_0, window_bounds = array<i64: 144, 256>}, {pipeline_mode = #tpu.pipeline_mode<synchronous>, transform_indices = @transform_1, window_bounds = array<i64: 16, 144>}, {pipeline_mode = #tpu.pipeline_mode<synchronous>, transform_indices = @transform_2, window_bounds = array<i64: 16, 1>}, {transform_indices = @transform_3, window_bounds = array<i64: 16, 256>}]} {
    %c0 = arith.constant 0 : index
    %c0_0 = arith.constant 0 : index
    %0 = vector.load %arg2[%c0, %c0_0] : memref<16x144xf32, #tpu.memory_space<vmem>>, vector<16x144xf32>
    %c0_1 = arith.constant 0 : index
    %c0_2 = arith.constant 0 : index
    %1 = vector.load %arg1[%c0_1, %c0_2] : memref<144x256xf32, #tpu.memory_space<vmem>>, vector<144x256xf32>
    %cst = arith.constant dense<0.000000e+00> : vector<16x256xf32>
    %2 = tpu.matmul %0, %1, %cst {dimension_numbers = #tpu.dot_dimension_numbers<[1], [0], [0], [1], [0, 0, 1, 1], [], []>} : vector<16x144xf32>, vector<144x256xf32>, vector<16x256xf32> -> vector<16x256xf32>
    %c0_3 = arith.constant 0 : index
    %c0_4 = arith.constant 0 : index
    %3 = vector.load %arg3[%c0_3, %c0_4] : memref<16x1xf32, #tpu.memory_space<vmem>>, vector<16x1xf32>
    %4 = vector.broadcast %3 : vector<16x1xf32> to vector<16x256xf32>
    %5 = arith.addf %2, %4 : vector<16x256xf32>
    %6 = vector.extract_strided_slice %5 {offsets = [0, 0], sizes = [8, 256], strides = [1, 1]} : vector<16x256xf32> to vector<8x256xf32>
    %7 = arith.negf %6 : vector<8x256xf32>
    %8 = math.exp %7 : vector<8x256xf32>
    %cst_5 = arith.constant 1.000000e+00 : f32
    %9 = vector.broadcast %cst_5 : f32 to vector<8x256xf32>
    %10 = arith.addf %9, %8 : vector<8x256xf32>
    %11 = arith.divf %9, %10 : vector<8x256xf32>
    %12 = vector.extract_strided_slice %5 {offsets = [8, 0], sizes = [8, 256], strides = [1, 1]} : vector<16x256xf32> to vector<8x256xf32>
    %13 = math.tanh %12 : vector<8x256xf32>
    %14 = arith.mulf %11, %13 : vector<8x256xf32>
    %15 = tpu.concatenate %14, %11 in 0 : vector<8x256xf32>, vector<8x256xf32> -> vector<16x256xf32>
    %c0_6 = arith.constant 0 : index
    %c0_7 = arith.constant 0 : index
    %16 = vector.load %arg4[%c0_6, %c0_7] : memref<16x256xf32, #tpu.memory_space<vmem>>, vector<16x256xf32>
    tpu.vector_store %arg4[%c0_6, %c0_7], %15 {strides = array<i32>} : memref<16x256xf32, #tpu.memory_space<vmem>>, vector<16x256xf32>,
    return
  }
  func.func @transform_0(%arg0: i32) -> (i32, i32) {
    %c0_i32 = arith.constant 0 : i32
    %c0_i32_0 = arith.constant 0 : i32
    return %c0_i32, %arg0 : i32, i32
  }
  func.func @transform_1(%arg0: i32) -> (i32, i32) {
    %c0_i32 = arith.constant 0 : i32
    %c0_i32_0 = arith.constant 0 : i32
    %c0_i32_1 = arith.constant 0 : i32
    return %c0_i32, %c0_i32_0 : i32, i32
  }
  func.func @transform_2(%arg0: i32) -> (i32, i32) {
    %c0_i32 = arith.constant 0 : i32
    %c0_i32_0 = arith.constant 0 : i32
    %c0_i32_1 = arith.constant 0 : i32
    return %c0_i32, %c0_i32_0 : i32, i32
  }
  func.func @transform_3(%arg0: i32) -> (i32, i32) {
    %c0_i32 = arith.constant 0 : i32
    %c0_i32_0 = arith.constant 0 : i32
    return %c0_i32, %arg0 : i32, i32
  }
}

</mosaic_0001>

<llo_original>
// kernel: rbm_cell_forward.1
$region0: #{rbm_cell_forward.1}
  #allocation0 [shape = 'u32[]', space=smem, size = 0x4, offset = 0x4, fixed_abs, tag = 'smem constant byte address 0x4 - core index']
  #allocation1 [shape = 'u32[72,128]{1,0:T(1,128)}', space=vmem, size = 0x9000, scoped, tag = 'internal scratch']
  %s0 = inlined_call_operand.vmem [shape: f32[144,512], index: 0, kind: input, shape index: {}]
  %s1 = inlined_call_operand.vmem [shape: f32[16,144], index: 1, kind: input, shape index: {}]
  %s2 = inlined_call_operand.vmem [shape: f32[16,1], index: 2, kind: input, shape index: {}]
  %s3 = inlined_call_operand.vmem [shape: f32[16,512], index: 3, kind: output, shape index: {}]
  %s4 = sld [smem:[#allocation0]]
  $region87: #{rbm_cell_forward.1} parent=0
    _
  %s6 = ssub.s32 1, %s4
  %s7 = scalar_select 0, %s6, %s4
  $region1: #{rbm_cell_forward.1} parent=0
    #allocation2 [shape = 'u8[294912]{0}', space=vmem, size = 0x48000, scoped, tag = 'input window, operand 0']
    #allocation3 [shape = 'u8[32768]{0}', space=vmem, size = 0x8000, scoped, tag = 'output window, operand 0']
    loop: start=0, step=1, limit=4
    $region2: #{rbm_cell_forward.1} parent=1 // loop_pre_header
      _
    $region3: #{rbm_cell_forward.1} parent=1 // loop_header
      %s9 = sphi 0, %s13
      %p10 = scmp.ge.s32.totalorder %s9, 4
      %s19 = sphi 0, %s21
      %s22 = sphi 0, %s19
      %s23 = sphi 0, %s22
      %s39 = sphi 0, %s23
      %s43 = sphi 0, %s43
      %s45 = sphi 0, %s43
      %s46 = sphi 0, %s45
      %s60 = sphi 0, %s46
      %s64 = sphi 0, %s64
      %s66 = sphi 0, %s64
      %s67 = sphi 0, %s66
      %s81 = sphi 0, %s67
      %s87 = sphi 0, %s89
      %s90 = sphi 0, %s87
      %s91 = sphi 0, %s90
      %s107 = sphi 0, %s91
    $region4: #{rbm_cell_forward.1} parent=1 // loop_header_branch
      %12 = sbr.rel (%p10) target = $region8
    $region5: #{rbm_cell_forward.1} parent=1 // loop_body
      %s14 = ssub.s32 %s9, 1
      %s15 = ssub.s32 %s9, 2
      %s16 = sadd.s32 %s9, 1
      %s17 = ssub.s32 %s9, %s16
      %p18 = scmp.eq.s32.totalorder %s17, 0
      %s20 = sadd.s32 %s19, 1
      %s21 = scalar_select %p18, %s19, %s20
      %p24 = pneg %p18
      %p25 = scmp.eq.s32.totalorder %s9, 1
      %p26 = por %p24, %p25
      %p27 = scmp.ne.s32.totalorder %s19, %s22
      %p28 = scmp.eq.s32.totalorder %s9, 0
      %p29 = por %p27, %p28
      %p30 = scmp.ne.s32.totalorder %s19, %s22
      %p31 = scmp.eq.s32.totalorder %s14, 1
      %p32 = por %p30, %p31
      %p33 = scmp.ne.s32.totalorder %s22, %s23
      %p34 = scmp.eq.s32.totalorder %s14, 0
      %p35 = por %p33, %p34
      %p36 = scmp.ne.s32.totalorder %s22, %s23
      %p37 = scmp.eq.s32.totalorder %s15, 1
      %p38 = por %p36, %p37
      %p40 = scmp.ne.s32.totalorder %s23, %s39
      %p41 = scmp.eq.s32.totalorder %s15, 0
      %p42 = por %p40, %p41
      %s44 = sadd.s32 %s43, 1
      %p47 = scmp.eq.s32.totalorder %s9, 1
      %p48 = scmp.ne.s32.totalorder %s43, %s45
      %p49 = scmp.eq.s32.totalorder %s9, 0
      %p50 = por %p48, %p49
      %p51 = scmp.ne.s32.totalorder %s43, %s45
      %p52 = scmp.eq.s32.totalorder %s14, 1
      %p53 = por %p51, %p52
      %p54 = scmp.ne.s32.totalorder %s45, %s46
      %p55 = scmp.eq.s32.totalorder %s14, 0
      %p56 = por %p54, %p55
      %p57 = scmp.ne.s32.totalorder %s45, %s46
      %p58 = scmp.eq.s32.totalorder %s15, 1
      %p59 = por %p57, %p58
      %p61 = scmp.ne.s32.totalorder %s46, %s60
      %p62 = scmp.eq.s32.totalorder %s15, 0
      %p63 = por %p61, %p62
      %s65 = sadd.s32 %s64, 1
      %p68 = scmp.eq.s32.totalorder %s9, 1
      %p69 = scmp.ne.s32.totalorder %s64, %s66
      %p70 = scmp.eq.s32.totalorder %s9, 0
      %p71 = por %p69, %p70
      %p72 = scmp.ne.s32.totalorder %s64, %s66
      %p73 = scmp.eq.s32.totalorder %s14, 1
      %p74 = por %p72, %p73
      %p75 = scmp.ne.s32.totalorder %s66, %s67
      %p76 = scmp.eq.s32.totalorder %s14, 0
      %p77 = por %p75, %p76
      %p78 = scmp.ne.s32.totalorder %s66, %s67
      %p79 = scmp.eq.s32.totalorder %s15, 1
      %p80 = por %p78, %p79
      %p82 = scmp.ne.s32.totalorder %s67, %s81
      %p83 = scmp.eq.s32.totalorder %s15, 0
      %p84 = por %p82, %p83
      %s85 = ssub.s32 %s9, %s16
      %p86 = scmp.eq.s32.totalorder %s85, 0
      %s88 = sadd.s32 %s87, 1
      %s89 = scalar_select %p86, %s87, %s88
      %p92 = pneg %p86
      %p93 = scmp.eq.s32.totalorder %s9, 1
      %p94 = por %p92, %p93
      %p95 = scmp.ne.s32.totalorder %s87, %s90
      %p96 = scmp.eq.s32.totalorder %s9, 0
      %p97 = por %p95, %p96
      %p98 = scmp.ne.s32.totalorder %s87, %s90
      %p99 = scmp.eq.s32.totalorder %s14, 1
      %p100 = por %p98, %p99
      %p101 = scmp.ne.s32.totalorder %s90, %s91
      %p102 = scmp.eq.s32.totalorder %s14, 0
      %p103 = por %p101, %p102
      %p104 = scmp.ne.s32.totalorder %s90, %s91
      %p105 = scmp.eq.s32.totalorder %s15, 1
      %p106 = por %p104, %p105
      %p108 = scmp.ne.s32.totalorder %s91, %s107
      %p109 = scmp.eq.s32.totalorder %s15, 0
      %p110 = por %p108, %p109
      %p111 = scmp.le.s32.totalorder 1, %s9
      %p112 = scmp.lt.s32.totalorder %s9, 3
      %p113 = pnand %p111, %p112
      %p114 = pneg %p113
      // Predicated region
      $region9: #{rbm_cell_forward.1} parent=5 // pred_check
        _
      $region10: #{rbm_cell_forward.1} parent=5 // pred_check_branch
        %116 = sbr.rel (%p113) target = $region12
      $region11: #{rbm_cell_forward.1} parent=5 // pred_region
        %s117 = ssub.s32 %s9, 1
        // Predicated region
        $region13: #{rbm_cell_forward.1} parent=11 // pred_check
          %p118 = pneg %p56
        $region14: #{rbm_cell_forward.1} parent=11 // pred_check_branch
          %120 = sbr.rel (%p118) target = $region16
        $region15: #{rbm_cell_forward.1} parent=11 // pred_region
          _
        $region16: #{rbm_cell_forward.1} parent=11 // pred_fallthru
          _
        // Predicated region
        $region17: #{rbm_cell_forward.1} parent=11 // pred_check
          %p121 = pneg %p77
        $region18: #{rbm_cell_forward.1} parent=11 // pred_check_branch
          %123 = sbr.rel (%p121) target = $region20
        $region19: #{rbm_cell_forward.1} parent=11 // pred_region
          _
        $region20: #{rbm_cell_forward.1} parent=11 // pred_fallthru
          _
      $region12: #{rbm_cell_forward.1} parent=5 // pred_fallthru
        _
      %p124 = scmp.lt.s32.totalorder %s9, 2
      // Predicated region
      $region21: #{rbm_cell_forward.1} parent=5 // pred_check
        %p125 = pneg %p124
      $region22: #{rbm_cell_forward.1} parent=5 // pred_check_branch
        %127 = sbr.rel (%p125) target = $region24
      $region23: #{rbm_cell_forward.1} parent=5 // pred_region
        // Predicated region
        $region25: #{rbm_cell_forward.1} parent=23 // pred_check
          %p128 = pneg %p29
        $region26: #{rbm_cell_forward.1} parent=23 // pred_check_branch
          %130 = sbr.rel (%p128) target = $region28
        $region27: #{rbm_cell_forward.1} parent=23 // pred_region
          %s131 = sand.u32 %s19, 1
          %s132 = sand.u32 %s19, 1
          %s133 = smul.addr %s132, 288
          %s134 = scalar_lea.vmem [#allocation2], %s133
          %s135 = smul.u32 2, %s9
          %s136 = smul.addr %s135, 8
          %s137 = scalar_lea.vmem %s0, %s136
          // Predicated region
          $region29: #{rbm_cell_forward.1} parent=27 // pred_check
            _
          $region30: #{rbm_cell_forward.1} parent=27 // pred_check_branch
            %139 = sbr.rel (0) target = $region32
          $region31: #{rbm_cell_forward.1} parent=27 // pred_region
            // Predicated region
            $region33: #{rbm_cell_forward.1} parent=31 // pred_check
              _
            $region34: #{rbm_cell_forward.1} parent=31 // pred_check_branch
              %141 = sbr.rel (0) target = $region36
            $region35: #{rbm_cell_forward.1} parent=31 // pred_region
              loop: start=0, step=1, limit=1
              $region37: #{rbm_cell_forward.1} parent=35 // loop_pre_header
                _
              $region38: #{rbm_cell_forward.1} parent=35 // loop_header
                %s143 = sphi 0, %s147
                %p144 = scmp.ge.s32.totalorder %s143, 1
                %s148 = sphi %s137, %s137
                %s149 = sphi %s134, %s134
              $region39: #{rbm_cell_forward.1} parent=35 // loop_header_branch
                %146 = sbr.rel (%p144) target = $region43
              $region40: #{rbm_cell_forward.1} parent=35 // loop_body
                %v150 = vld [vmem:[%s148] sm:$0xff]
                %151 = vst [vmem:[%s149] sm:$0xff] %v150
                %v152 = vld [vmem:[%s148 + $0x8] sm:$0xff]
                %153 = vst [vmem:[%s149 + $0x8] sm:$0xff] %v152
                %v154 = vld [vmem:[%s148 + $0x20] sm:$0xff]
                %155 = vst [vmem:[%s149 + $0x10] sm:$0xff] %v154
                %v156 = vld [vmem:[%s148 + $0x28] sm:$0xff]
                %157 = vst [vmem:[%s149 + $0x18] sm:$0xff] %v156
                %v158 = vld [vmem:[%s148 + $0x40] sm:$0xff]
                %159 = vst [vmem:[%s149 + $0x20] sm:$0xff] %v158
                %v160 = vld [vmem:[%s148 + $0x48] sm:$0xff]
                %161 = vst [vmem:[%s149 + $0x28] sm:$0xff] %v160
                %v162 = vld [vmem:[%s148 + $0x60] sm:$0xff]
                %163 = vst [vmem:[%s149 + $0x30] sm:$0xff] %v162
                %v164 = vld [vmem:[%s148 + $0x68] sm:$0xff]
                %165 = vst [vmem:[%s149 + $0x38] sm:$0xff] %v164
                %v166 = vld [vmem:[%s148 + $0x80] sm:$0xff]
                %167 = vst [vmem:[%s149 + $0x40] sm:$0xff] %v166
                %v168 = vld [vmem:[%s148 + $0x88] sm:$0xff]
                %169 = vst [vmem:[%s149 + $0x48] sm:$0xff] %v168
                %v170 = vld [vmem:[%s148 + $0xa0] sm:$0xff]
                %171 = vst [vmem:[%s149 + $0x50] sm:$0xff] %v170
                %v172 = vld [vmem:[%s148 + $0xa8] sm:$0xff]
                %173 = vst [vmem:[%s149 + $0x58] sm:$0xff] %v172
                %v174 = vld [vmem:[%s148 + $0xc0] sm:$0xff]
                %175 = vst [vmem:[%s149 + $0x60] sm:$0xff] %v174
                %v176 = vld [vmem:[%s148 + $0xc8] sm:$0xff]
                %177 = vst [vmem:[%s149 + $0x68] sm:$0xff] %v176
                %v178 = vld [vmem:[%s148 + $0xe0] sm:$0xff]
                %179 = vst [vmem:[%s149 + $0x70] sm:$0xff] %v178
                %v180 = vld [vmem:[%s148 + $0xe8] sm:$0xff]
                %181 = vst [vmem:[%s149 + $0x78] sm:$0xff] %v180
                %v182 = vld [vmem:[%s148 + $0x100] sm:$0xff]
                %183 = vst [vmem:[%s149 + $0x80] sm:$0xff] %v182
                %v184 = vld [vmem:[%s148 + $0x108] sm:$0xff]
                %185 = vst [vmem:[%s149 + $0x88] sm:$0xff] %v184
                %v186 = vld [vmem:[%s148 + $0x120] sm:$0xff]
                %187 = vst [vmem:[%s149 + $0x90] sm:$0xff] %v186
                %v188 = vld [vmem:[%s148 + $0x128] sm:$0xff]
                %189 = vst [vmem:[%s149 + $0x98] sm:$0xff] %v188
                %v190 = vld [vmem:[%s148 + $0x140] sm:$0xff]
                %191 = vst [vmem:[%s149 + $0xa0] sm:$0xff] %v190
                %v192 = vld [vmem:[%s148 + $0x148] sm:$0xff]
                %193 = vst [vmem:[%s149 + $0xa8] sm:$0xff] %v192
                %v194 = vld [vmem:[%s148 + $0x160] sm:$0xff]
                %195 = vst [vmem:[%s149 + $0xb0] sm:$0xff] %v194
                %v196 = vld [vmem:[%s148 + $0x168] sm:$0xff]
                %197 = vst [vmem:[%s149 + $0xb8] sm:$0xff] %v196
                %v198 = vld [vmem:[%s148 + $0x180] sm:$0xff]
                %199 = vst [vmem:[%s149 + $0xc0] sm:$0xff] %v198
                %v200 = vld [vmem:[%s148 + $0x188] sm:$0xff]
                %201 = vst [vmem:[%s149 + $0xc8] sm:$0xff] %v200
                %v202 = vld [vmem:[%s148 + $0x1a0] sm:$0xff]
                %203 = vst [vmem:[%s149 + $0xd0] sm:$0xff] %v202
                %v204 = vld [vmem:[%s148 + $0x1a8] sm:$0xff]
                %205 = vst [vmem:[%s149 + $0xd8] sm:$0xff] %v204
                %v206 = vld [vmem:[%s148 + $0x1c0] sm:$0xff]
                %207 = vst [vmem:[%s149 + $0xe0] sm:$0xff] %v206
                %v208 = vld [vmem:[%s148 + $0x1c8] sm:$0xff]
                %209 = vst [vmem:[%s149 + $0xe8] sm:$0xff] %v208
                %v210 = vld [vmem:[%s148 + $0x1e0] sm:$0xff]
                %211 = vst [vmem:[%s149 + $0xf0] sm:$0xff] %v210
                %v212 = vld [vmem:[%s148 + $0x1e8] sm:$0xff]
                %213 = vst [vmem:[%s149 + $0xf8] sm:$0xff] %v212
                %v214 = vld [vmem:[%s148 + $0x200] sm:$0xff]
                %215 = vst [vmem:[%s149 + $0x100] sm:$0xff] %v214
                %v216 = vld [vmem:[%s148 + $0x208] sm:$0xff]
                %217 = vst [vmem:[%s149 + $0x108] sm:$0xff] %v216
                %v218 = vld [vmem:[%s148 + $0x220] sm:$0xff]
                %219 = vst [vmem:[%s149 + $0x110] sm:$0xff] %v218
                %v220 = vld [vmem:[%s148 + $0x228] sm:$0xff]
                %221 = vst [vmem:[%s149 + $0x118] sm:$0xff] %v220
              $region41: #{rbm_cell_forward.1} parent=35 // loop_footer
                %s147 = sadd.s32 1, %s143
              $region42: #{rbm_cell_forward.1} parent=35 // loop_footer_branch
                %142 = sbr.rel target = $region38
              $region43: #{rbm_cell_forward.1} parent=35 // loop_exit
                _
            $region36: #{rbm_cell_forward.1} parent=31 // pred_fallthru
              _
            // Predicated region
            $region44: #{rbm_cell_forward.1} parent=31 // pred_check
              _
            $region45: #{rbm_cell_forward.1} parent=31 // pred_check_branch
              %223 = sbr.rel target = $region47
            $region46: #{rbm_cell_forward.1} parent=31 // pred_region
              _
            $region47: #{rbm_cell_forward.1} parent=31 // pred_fallthru
              _
          $region32: #{rbm_cell_forward.1} parent=27 // pred_fallthru
            _
          %224 = vnop
        $region28: #{rbm_cell_forward.1} parent=23 // pred_fallthru
          _
      $region24: #{rbm_cell_forward.1} parent=5 // pred_fallthru
        _
      %p225 = scmp.le.s32.totalorder 1, %s9
      %p226 = scmp.lt.s32.totalorder %s9, 3
      %p227 = pnand %p225, %p226
      %p228 = pneg %p227
      // Predicated region
      $region48: #{rbm_cell_forward.1} parent=5 // pred_check
        _
      $region49: #{rbm_cell_forward.1} parent=5 // pred_check_branch
        %230 = sbr.rel (%p227) target = $region51
      $region50: #{rbm_cell_forward.1} parent=5 // pred_region
        %s231 = ssub.s32 %s9, 1
        %s232 = sand.u32 %s22, 1
        %s233 = sand.u32 %s22, 1
        %s234 = smul.addr %s233, 288
        %s235 = scalar_lea.vmem [#allocation2], %s234
        // Predicated region
        $region52: #{rbm_cell_forward.1} parent=50 // pred_check
          %p236 = pneg %p35
        $region53: #{rbm_cell_forward.1} parent=50 // pred_check_branch
          %238 = sbr.rel (%p236) target = $region55
        $region54: #{rbm_cell_forward.1} parent=50 // pred_region
          _
        $region55: #{rbm_cell_forward.1} parent=50 // pred_fallthru
          _
        %s239 = sand.u32 %s22, 1
        %s240 = sand.u32 %s22, 1
        %s241 = smul.addr %s240, 288
        %s242 = scalar_lea.vmem [#allocation2], %s241
        %p243 = pneg %p35
        %p244 = pneg %p32
        %p245 = pneg %p56
        %p246 = pneg %p53
        %p247 = pneg %p77
        %p248 = pneg %p74
        %p249 = pneg %p103
        %p250 = pneg %p100
        %s251 = sand.u32 %s90, 1
        %s252 = sand.u32 %s90, 1
        %s253 = smul.addr %s252, 32
        %s254 = scalar_lea.vmem [#allocation3], %s253
        %s255 = smul.u32 2, %s14
        %s256 = smul.u32 2, %s14
        %v257 = vld [vmem:[%s1] sm:$0xff]
        %v258 = vld [vmem:[%s1 + $0x8] sm:$0xff]
        %v259 = vld [vmem:[%s1 + $0x10] sm:$0xff]
        %v260 = vld [vmem:[%s1 + $0x18] sm:$0xff]
        %v261 = vld [vmem:[%s235] sm:$0xff]
        %v262 = vld [vmem:[%s235 + $0x8] sm:$0xff]
        %v263 = vld [vmem:[%s235 + $0x10] sm:$0xff]
        %v264 = vld [vmem:[%s235 + $0x18] sm:$0xff]
        %v265 = vld [vmem:[%s235 + $0x20] sm:$0xff]
        %v266 = vld [vmem:[%s235 + $0x28] sm:$0xff]
        %v267 = vld [vmem:[%s235 + $0x30] sm:$0xff]
        %v268 = vld [vmem:[%s235 + $0x38] sm:$0xff]
        %v269 = vld [vmem:[%s235 + $0x40] sm:$0xff]
        %v270 = vld [vmem:[%s235 + $0x48] sm:$0xff]
        %v271 = vld [vmem:[%s235 + $0x50] sm:$0xff]
        %v272 = vld [vmem:[%s235 + $0x58] sm:$0xff]
        %v273 = vld [vmem:[%s235 + $0x60] sm:$0xff]
        %v274 = vld [vmem:[%s235 + $0x68] sm:$0xff]
        %v275 = vld [vmem:[%s235 + $0x70] sm:$0xff]
        %v276 = vld [vmem:[%s235 + $0x78] sm:$0xff]
        %v277 = vld [vmem:[%s235 + $0x80] sm:$0xff]
        %v278 = vld [vmem:[%s235 + $0x88] sm:$0xff]
        %v279 = vld [vmem:[%s235 + $0x90] sm:$0xff]
        %v280 = vld [vmem:[%s235 + $0x98] sm:$0xff]
        %v281 = vld [vmem:[%s235 + $0xa0] sm:$0xff]
        %v282 = vld [vmem:[%s235 + $0xa8] sm:$0xff]
        %v283 = vld [vmem:[%s235 + $0xb0] sm:$0xff]
        %v284 = vld [vmem:[%s235 + $0xb8] sm:$0xff]
        %v285 = vld [vmem:[%s235 + $0xc0] sm:$0xff]
        %v286 = vld [vmem:[%s235 + $0xc8] sm:$0xff]
        %v287 = vld [vmem:[%s235 + $0xd0] sm:$0xff]
        %v288 = vld [vmem:[%s235 + $0xd8] sm:$0xff]
        %v289 = vld [vmem:[%s235 + $0xe0] sm:$0xff]
        %v290 = vld [vmem:[%s235 + $0xe8] sm:$0xff]
        %v291 = vld [vmem:[%s235 + $0xf0] sm:$0xff]
        %v292 = vld [vmem:[%s235 + $0xf8] sm:$0xff]
        %v293 = vld [vmem:[%s235 + $0x100] sm:$0xff]
        %v294 = vld [vmem:[%s235 + $0x108] sm:$0xff]
        %v295 = vld [vmem:[%s235 + $0x110] sm:$0xff]
        %v296 = vld [vmem:[%s235 + $0x118] sm:$0xff]
        %v297 = vld [vmem:[%s2] sm:$0xff]
        %v298 = vld [vmem:[%s2 + $0x8] sm:$0xff]
        %300 = vset.pattern.permute.xlu0 0
        %301 = vperm.xlu0 %300, %v297
        %v302 = vpop.permute.xlu0 %301
        %305 = vset.pattern.permute.xlu0 0
        %306 = vperm.xlu0 %305, %v298
        %v307 = vpop.permute.xlu0 %306
        %vm309 = vcmask 130048
        %v311 = vsel %vm309, %v258, 0
        %v314 = vsel %vm309, %v260, 0
        %316 = vmatpush.msra.mxu0 %v291
        %317 = vmatpush.msra.mxu0 %v289
        %318 = vmatpush.msra.mxu0 %v287
        %319 = vmatpush.msra.mxu0 %v285
        %320 = vmatpush.msra.mxu0 %v283
        %321 = vmatpush.msra.mxu0 %v281
        %322 = vmatpush.msra.mxu0 %v279
        %323 = vmatpush.msra.mxu0 %v277
        %324 = vmatpush.msra.mxu0 %v275
        %325 = vmatpush.msra.mxu0 %v273
        %326 = vmatpush.msra.mxu0 %v271
        %327 = vmatpush.msra.mxu0 %v269
        %328 = vmatpush.msra.mxu0 %v267
        %329 = vmatpush.msra.mxu0 %v265
        %330 = vmatpush.msra.mxu0 %v263
        %331 = vmatpush.msra.mxu0 %v261
        %332 = vmatmul.f32.gmra.mxu0 %v257
        %v333 = vpop.f32.mrf.mxu0
        %v334 = vadd.f32 %v302, %v333
        %335 = vmatmul.f32.gmra.mxu0 %v259
        %v336 = vpop.f32.mrf.mxu0
        %v337 = vadd.f32 %v307, %v336
        %338 = vdwg.mxu0
        %339 = vmatpush.msra.mxu0 0.0
        %340 = vmatpush.msra.mxu0 0.0
        %341 = vmatpush.msra.mxu0 0.0
        %342 = vmatpush.msra.mxu0 0.0
        %343 = vmatpush.msra.mxu0 0.0
        %344 = vmatpush.msra.mxu0 0.0
        %345 = vmatpush.msra.mxu0 0.0
        %346 = vmatpush.msra.mxu0 0.0
        %347 = vmatpush.msra.mxu0 0.0
        %348 = vmatpush.msra.mxu0 0.0
        %349 = vmatpush.msra.mxu0 0.0
        %350 = vmatpush.msra.mxu0 0.0
        %351 = vmatpush.msra.mxu0 0.0
        %352 = vmatpush.msra.mxu0 0.0
        %353 = vmatpush.msra.mxu0 %v295
        %354 = vmatpush.msra.mxu0 %v293
        %355 = vmatmul.f32.gmra.mxu0 %v311
        %v356 = vpop.f32.mrf.mxu0
        %v357 = vadd.f32 %v334, %v356
        %358 = vmatmul.f32.gmra.mxu0 %v314
        %v359 = vpop.f32.mrf.mxu0
        %v360 = vadd.f32 %v337, %v359
        %361 = vdwg.mxu0
        %362 = vmatpush.msra.mxu0 %v292
        %363 = vmatpush.msra.mxu0 %v290
        %364 = vmatpush.msra.mxu0 %v288
        %365 = vmatpush.msra.mxu0 %v286
        %366 = vmatpush.msra.mxu0 %v284
        %367 = vmatpush.msra.mxu0 %v282
        %368 = vmatpush.msra.mxu0 %v280
        %369 = vmatpush.msra.mxu0 %v278
        %370 = vmatpush.msra.mxu0 %v276
        %371 = vmatpush.msra.mxu0 %v274
        %372 = vmatpush.msra.mxu0 %v272
        %373 = vmatpush.msra.mxu0 %v270
        %374 = vmatpush.msra.mxu0 %v268
        %375 = vmatpush.msra.mxu0 %v266
        %376 = vmatpush.msra.mxu0 %v264
        %377 = vmatpush.msra.mxu0 %v262
        %378 = vmatmul.f32.gmra.mxu0 %v257
        %v379 = vpop.f32.mrf.mxu0
        %v380 = vadd.f32 %v302, %v379
        %381 = vmatmul.f32.gmra.mxu0 %v259
        %v382 = vpop.f32.mrf.mxu0
        %v383 = vadd.f32 %v307, %v382
        %384 = vdwg.mxu0
        %385 = vmatpush.msra.mxu0 0.0
        %386 = vmatpush.msra.mxu0 0.0
        %387 = vmatpush.msra.mxu0 0.0
        %388 = vmatpush.msra.mxu0 0.0
        %389 = vmatpush.msra.mxu0 0.0
        %390 = vmatpush.msra.mxu0 0.0
        %391 = vmatpush.msra.mxu0 0.0
        %392 = vmatpush.msra.mxu0 0.0
        %393 = vmatpush.msra.mxu0 0.0
        %394 = vmatpush.msra.mxu0 0.0
        %395 = vmatpush.msra.mxu0 0.0
        %396 = vmatpush.msra.mxu0 0.0
        %397 = vmatpush.msra.mxu0 0.0
        %398 = vmatpush.msra.mxu0 0.0
        %399 = vmatpush.msra.mxu0 %v296
        %400 = vmatpush.msra.mxu0 %v294
        %401 = vmatmul.f32.gmra.mxu0 %v311
        %v402 = vpop.f32.mrf.mxu0
        %v403 = vadd.f32 %v380, %v402
        %404 = vmatmul.f32.gmra.mxu0 %v314
        %v405 = vpop.f32.mrf.mxu0
        %v406 = vadd.f32 %v383, %v405
        %407 = vdwg.mxu0
        %v408 = vxor.u32 %v357, 2147483648
        %v409 = vxor.u32 %v403, 2147483648
        %v410 = vmul.f32 %v408, 1.442695
        %v411 = vpow.pop %v410
        %v412 = vmul.f32 %v409, 1.442695
        %v413 = vpow.pop %v412
        %v414 = vadd.f32 %v411, 1.0
        %v415 = vadd.f32 %v413, 1.0
        %v416 = vrcp.pop %v414
        %v417 = vmul.f32 %v414, %v416
        %v418 = vsub.f32 1.0, %v417
        %v419 = vmul.f32 %v416, %v418
        %v420 = vadd.f32 %v416, %v419
        %vm421 = vweird.f32 %v414
        %vm422 = vweird.f32 %v416
        %vm423 = vmor %vm421, %vm422
        %v424 = vsel %vm423, %v416, %v420
        %v425 = vand.u32 2147483647, %v414
        %vm426 = vcmp.eq.f32.partialorder %v425, 8.507059e+37
        %v427 = vand.u32 %v414, 2147483648
        %v428 = vor.u32 1.1754944e-38, %v427
        %v429 = vsel %vm426, %v428, %v424
        %v430 = vmul.f32 1.0, %v429
        %v431 = vrcp.pop %v415
        %v432 = vmul.f32 %v415, %v431
        %v433 = vsub.f32 1.0, %v432
        %v434 = vmul.f32 %v431, %v433
        %v435 = vadd.f32 %v431, %v434
        %vm436 = vweird.f32 %v415
        %vm437 = vweird.f32 %v431
        %vm438 = vmor %vm436, %vm437
        %v439 = vsel %vm438, %v431, %v435
        %v440 = vand.u32 2147483647, %v415
        %vm441 = vcmp.eq.f32.partialorder %v440, 8.507059e+37
        %v442 = vand.u32 %v415, 2147483648
        %v443 = vor.u32 1.1754944e-38, %v442
        %v444 = vsel %vm441, %v443, %v439
        %v445 = vmul.f32 1.0, %v444
        %v446 = vtanh.pop %v360
        %v447 = vtanh.pop %v406
        %v448 = vmul.f32 %v430, %v446
        %v449 = vmul.f32 %v445, %v447
        %450 = vst [vmem:[%s254] sm:$0xff] %v448
        %451 = vst [vmem:[%s254 + $0x8] sm:$0xff] %v449
        %452 = vst [vmem:[%s254 + $0x10] sm:$0xff] %v430
        %453 = vst [vmem:[%s254 + $0x18] sm:$0xff] %v445
        %s454 = sand.u32 %s90, 1
        %s455 = sand.u32 %s90, 1
        %s456 = smul.addr %s455, 32
        %s457 = scalar_lea.vmem [#allocation3], %s456
        // Predicated region
        $region56: #{rbm_cell_forward.1} parent=50 // pred_check
          %p458 = pneg %p100
        $region57: #{rbm_cell_forward.1} parent=50 // pred_check_branch
          %460 = sbr.rel (%p458) target = $region59
        $region58: #{rbm_cell_forward.1} parent=50 // pred_region
          %s461 = smul.u32 2, %s14
          %s462 = smul.addr %s461, 8
          %s463 = scalar_lea.vmem %s3, %s462
          // Predicated region
          $region60: #{rbm_cell_forward.1} parent=58 // pred_check
            _
          $region61: #{rbm_cell_forward.1} parent=58 // pred_check_branch
            %465 = sbr.rel (0) target = $region63
          $region62: #{rbm_cell_forward.1} parent=58 // pred_region
            // Predicated region
            $region64: #{rbm_cell_forward.1} parent=62 // pred_check
              _
            $region65: #{rbm_cell_forward.1} parent=62 // pred_check_branch
              %467 = sbr.rel (0) target = $region67
            $region66: #{rbm_cell_forward.1} parent=62 // pred_region
              loop: start=0, step=1, limit=1
              $region68: #{rbm_cell_forward.1} parent=66 // loop_pre_header
                _
              $region69: #{rbm_cell_forward.1} parent=66 // loop_header
                %s469 = sphi 0, %s473
                %p470 = scmp.ge.s32.totalorder %s469, 1
                %s474 = sphi %s457, %s457
                %s475 = sphi %s463, %s463
              $region70: #{rbm_cell_forward.1} parent=66 // loop_header_branch
                %472 = sbr.rel (%p470) target = $region74
              $region71: #{rbm_cell_forward.1} parent=66 // loop_body
                %v476 = vld [vmem:[%s474] sm:$0xff]
                %477 = vst [vmem:[%s475] sm:$0xff] %v476
                %v478 = vld [vmem:[%s474 + $0x8] sm:$0xff]
                %479 = vst [vmem:[%s475 + $0x8] sm:$0xff] %v478
                %v480 = vld [vmem:[%s474 + $0x10] sm:$0xff]
                %481 = vst [vmem:[%s475 + $0x20] sm:$0xff] %v480
                %v482 = vld [vmem:[%s474 + $0x18] sm:$0xff]
                %483 = vst [vmem:[%s475 + $0x28] sm:$0xff] %v482
              $region72: #{rbm_cell_forward.1} parent=66 // loop_footer
                %s473 = sadd.s32 1, %s469
              $region73: #{rbm_cell_forward.1} parent=66 // loop_footer_branch
                %468 = sbr.rel target = $region69
              $region74: #{rbm_cell_forward.1} parent=66 // loop_exit
                _
            $region67: #{rbm_cell_forward.1} parent=62 // pred_fallthru
              _
            // Predicated region
            $region75: #{rbm_cell_forward.1} parent=62 // pred_check
              _
            $region76: #{rbm_cell_forward.1} parent=62 // pred_check_branch
              %485 = sbr.rel target = $region78
            $region77: #{rbm_cell_forward.1} parent=62 // pred_region
              _
            $region78: #{rbm_cell_forward.1} parent=62 // pred_fallthru
              _
          $region63: #{rbm_cell_forward.1} parent=58 // pred_fallthru
            _
          %486 = vnop
        $region59: #{rbm_cell_forward.1} parent=50 // pred_fallthru
          _
      $region51: #{rbm_cell_forward.1} parent=5 // pred_fallthru
        _
      %p487 = scmp.le.s32.totalorder 2, %s9
      // Predicated region
      $region79: #{rbm_cell_forward.1} parent=5 // pred_check
        %p488 = pneg %p487
      $region80: #{rbm_cell_forward.1} parent=5 // pred_check_branch
        %490 = sbr.rel (%p488) target = $region82
      $region81: #{rbm_cell_forward.1} parent=5 // pred_region
        %s491 = ssub.s32 %s9, 2
        // Predicated region
        $region83: #{rbm_cell_forward.1} parent=81 // pred_check
          %p492 = pneg %p106
        $region84: #{rbm_cell_forward.1} parent=81 // pred_check_branch
          %494 = sbr.rel (%p492) target = $region86
        $region85: #{rbm_cell_forward.1} parent=81 // pred_region
          %s495 = sand.u32 %s91, 1
          %s496 = sand.u32 %s91, 1
          %s497 = smul.addr %s496, 32
          %s498 = scalar_lea.vmem [#allocation3], %s497
        $region86: #{rbm_cell_forward.1} parent=81 // pred_fallthru
          _
      $region82: #{rbm_cell_forward.1} parent=5 // pred_fallthru
        _
    $region6: #{rbm_cell_forward.1} parent=1 // loop_footer
      %s13 = sadd.s32 1, %s9
    $region7: #{rbm_cell_forward.1} parent=1 // loop_footer_branch
      %8 = sbr.rel target = $region3
    $region8: #{rbm_cell_forward.1} parent=1 // loop_exit
      _

</llo_original>
